<compile_context>
chip_gen: v7x
topology: tpu7x:2x2x1
jax: 0.10.0
libtpu: 0.0.40
codegen_flags: <defaults>
</compile_context>

<pallas_src>
import jax
import jax.numpy as jnp
from jax.experimental import pallas as pl
from jax.experimental.pallas import tpu as pltpu


LANE = 128
SUBLANE = 8


def _round_up(x, m):
    return ((x + m - 1) // m) * m


def rbf_kernel(gamma_ref, a_ref, ct_ref, c2_ref, w_ref, o_ref):
    """One batch tile.

    gamma_ref : SMEM (1, 1) f32
    a_ref     : VMEM (TB, D)        f32  -- streamed batch tile
    ct_ref    : VMEM (D, K_pad)     f32  -- resident, pre-transposed centers
    c2_ref    : VMEM (1, K_pad)     f32  -- resident, precomputed ||c||^2
    w_ref     : VMEM (K_pad, O_pad) f32  -- resident, zero-padded weights
    o_ref     : VMEM (O_pad, TB)    f32  -- streamed TRANSPOSED output tile
                                            (lanes = batch -> lane-dense stores)
    """
    gamma = gamma_ref[0, 0]

    x = a_ref[...]                                             # (TB, D)
    x2 = jnp.sum(x * x, axis=-1, keepdims=True)                # (TB, 1)

    # Cross term on the MXU; contraction on D (centers pre-transposed, no
    # in-kernel relayout of the operands).
    xc = jnp.dot(x, ct_ref[...],
                 preferred_element_type=jnp.float32)           # (TB, K_pad)

    # ||x - c||^2 = ||x||^2 + ||c||^2 - 2 x.c   (cancellation near x==c is
    # clamped; exp(-gamma*d2) ~= 1 there so the absolute error is benign).
    d2 = jnp.maximum(x2 + c2_ref[...] - 2.0 * xc, 0.0)

    # EUP exp over (TB, K_pad). f32 (portable incl. v5e); revisit bf16 exp on
    # v6e/v7x only if EUP becomes the binding unit after the DMA fixes.
    phi = jnp.exp(-gamma * d2)                                 # (TB, K_pad)

    # Padded K rows of W are exactly zero, so padded phi columns are inert.
    out = jnp.dot(phi, w_ref[...],
                  preferred_element_type=jnp.float32)          # (TB, O_pad)

    # Cheap XLU transpose of the small (TB, O_pad=8) result -> lane-dense store.
    o_ref[...] = out.T                                         # (O_pad, TB)


def rbf_forward(a_vec, centers, gamma, weights, *, tb=1024, prefer_kernel=None):
    """Gaussian RBF layer: exp(-gamma * ||A_vec - centers||^2) @ weights."""
    B, D = a_vec.shape
    K, Dc = centers.shape
    Kw, O = weights.shape
    assert Dc == D and Kw == K

    if prefer_kernel is None:
        # Tiny problems are dominated by pallas_call launch + fixed per-step
        # overhead; let XLA fuse them.
        prefer_kernel = B >= 2048
    if not prefer_kernel:
        return rbf_reference(a_vec, centers, gamma, weights)

    K_pad = _round_up(K, LANE)        # lane-dense phi columns
    O_pad = _round_up(O, SUBLANE)     # output rows (sublanes) in transposed layout

    # ---- Batch tiling: batch rows become output LANES, so tiles are multiples
    # of 128.  Keep >= 2 grid steps when possible so both v7x TCs get work.
    B_pad = _round_up(max(B, 1), LANE)
    n_units = B_pad // LANE
    cap_units = max(1, min(tb, B_pad) // LANE)
    tb_units = min(cap_units, (n_units + 1) // 2) if n_units >= 2 else 1
    TB = tb_units * LANE
    B_pad = _round_up(B_pad, TB)
    grid = (B_pad // TB,)

    a_p = a_vec if B_pad == B else jnp.pad(a_vec, ((0, B_pad - B), (0, 0)))

    # One-time parameter prep (resident across all grid steps).  Zero padding of
    # centers/W keeps the padded phi columns / output rows inert.
    ct = jnp.pad(centers, ((0, K_pad - K), (0, 0))).T.astype(jnp.float32)      # (D, K_pad)
    c2 = jnp.pad(jnp.sum(centers * centers, axis=-1),
                 (0, K_pad - K)).reshape(1, K_pad).astype(jnp.float32)         # (1, K_pad)
    w_p = jnp.pad(weights, ((0, K_pad - K), (0, O_pad - O))).astype(jnp.float32)
    gamma_arr = jnp.asarray(gamma, jnp.float32).reshape(1, 1)

    out_t = pl.pallas_call(
        rbf_kernel,
        out_shape=jax.ShapeDtypeStruct((O_pad, B_pad), jnp.float32),
        grid=grid,
        in_specs=[
            pl.BlockSpec(memory_space=pltpu.MemorySpace.SMEM),      # gamma scalar
            pl.BlockSpec((TB, D), lambda i: (i, 0)),                # A_vec tile (streamed)
            pl.BlockSpec((D, K_pad), lambda i: (0, 0)),             # centers^T (resident)
            pl.BlockSpec((1, K_pad), lambda i: (0, 0)),             # ||c||^2  (resident)
            pl.BlockSpec((K_pad, O_pad), lambda i: (0, 0)),         # weights  (resident)
        ],
        out_specs=pl.BlockSpec((O_pad, TB), lambda i: (0, i)),      # transposed, lane-dense
        compiler_params=pltpu.CompilerParams(
            dimension_semantics=("parallel",),          # shard batch tiles across TCs (v7x)
            vmem_limit_bytes=32 * 1024 * 1024,
        ),
    )(gamma_arr, a_p, ct, c2, w_p)

    # Slice/transpose back on the tiny (O_pad, B_pad) result (not the old
    # 128-wide padded buffer).
    return out_t[:O, :B].T


def rbf_reference(a_vec, centers, gamma, weights):
    d2 = jnp.sum((a_vec[:, None, :] - centers[None, :, :]) ** 2, axis=-1)
    phi = jnp.exp(-gamma * d2)
    return phi @ weights


if __name__ == "__main__":
    # Small, deterministic shapes consistent with forward(A_vec); B large enough
    # to exercise the batch-tiled grid (2 tiles of 128, both v7x TCs busy).
    B, D, K, O = 256, 16, 32, 8   # batch, A_vec dim, num RBF centers, output dim

    key = jax.random.PRNGKey(0)
    k_a, k_c, k_w = jax.random.split(key, 3)

    a_vec   = jax.random.normal(k_a, (B, D), dtype=jnp.float32)
    centers = jax.random.normal(k_c, (K, D), dtype=jnp.float32)   # deterministic "rbf_model" params
    weights = jax.random.normal(k_w, (K, O), dtype=jnp.float32) * 0.1
    gamma   = 0.5

    ref = rbf_reference(a_vec, centers, gamma, weights)

    # Force the Pallas path (auto-dispatch would pick fused XLA at this size).
    out = jax.block_until_ready(
        rbf_forward(a_vec, centers, gamma, weights, prefer_kernel=True))
    assert out.shape == (B, O)
    assert jnp.allclose(out, ref, atol=1e-4, rtol=1e-4), "kernel mismatch vs. reference"

    # Auto-dispatch (small problem -> fused XLA) must agree too.
    out_auto = jax.block_until_ready(rbf_forward(a_vec, centers, gamma, weights))
    assert jnp.allclose(out_auto, ref, atol=1e-5, rtol=1e-5), "auto-dispatch mismatch"

    print("KERNEL_OK")
</pallas_src>

<mosaic_0001>
module attributes {stable_mosaic.version = 11 : i64} {
  func.func @rbf_kernel(%arg0: i32, %arg1: memref<1x1xf32, #tpu.memory_space<smem>>, %arg2: memref<128x16xf32, #tpu.memory_space<vmem>>, %arg3: memref<16x128xf32, #tpu.memory_space<vmem>>, %arg4: memref<1x128xf32, #tpu.memory_space<vmem>>, %arg5: memref<128x8xf32, #tpu.memory_space<vmem>>, %arg6: memref<8x128xf32, #tpu.memory_space<vmem>>) attributes {dimension_semantics = [#tpu.dimension_semantics<parallel>], iteration_bounds = array<i64: 2>, scalar_prefetch = 0 : i64, scratch_operands = 0 : i64, tpu.core_type = #tpu.core_type<tc>, window_params = [{transform_indices = @transform_0, window_bounds = array<i64: 1, 1>}, {transform_indices = @transform_1, window_bounds = array<i64: 128, 16>}, {pipeline_mode = #tpu.pipeline_mode<synchronous>, transform_indices = @transform_2, window_bounds = array<i64: 16, 128>}, {pipeline_mode = #tpu.pipeline_mode<synchronous>, transform_indices = @transform_3, window_bounds = array<i64: 1, 128>}, {pipeline_mode = #tpu.pipeline_mode<synchronous>, transform_indices = @transform_4, window_bounds = array<i64: 128, 8>}, {transform_indices = @transform_5, window_bounds = array<i64: 8, 128>}]} {
    %c0 = arith.constant 0 : index
    %c0_0 = arith.constant 0 : index
    %0 = memref.load %arg1[%c0, %c0_0] : memref<1x1xf32, #tpu.memory_space<smem>>
    %c0_1 = arith.constant 0 : index
    %c0_2 = arith.constant 0 : index
    %1 = vector.load %arg2[%c0_1, %c0_2] : memref<128x16xf32, #tpu.memory_space<vmem>>, vector<128x16xf32>
    %2 = arith.mulf %1, %1 : vector<128x16xf32>
    %cst = arith.constant dense<0.000000e+00> : vector<128xf32>
    %3 = vector.multi_reduction <add>, %2, %cst [1] : vector<128x16xf32> to vector<128xf32>
    %4 = vector.shape_cast %3 : vector<128xf32> to vector<128x1xf32>
    %c0_3 = arith.constant 0 : index
    %c0_4 = arith.constant 0 : index
    %5 = vector.load %arg3[%c0_3, %c0_4] : memref<16x128xf32, #tpu.memory_space<vmem>>, vector<16x128xf32>
    %cst_5 = arith.constant dense<0.000000e+00> : vector<128x128xf32>
    %6 = tpu.matmul %1, %5, %cst_5 {dimension_numbers = #tpu.dot_dimension_numbers<[1], [0], [0], [1], [0, 0, 1, 1], [], []>} : vector<128x16xf32>, vector<16x128xf32>, vector<128x128xf32> -> vector<128x128xf32>
    %c0_6 = arith.constant 0 : index
    %c0_7 = arith.constant 0 : index
    %7 = vector.load %arg4[%c0_6, %c0_7] : memref<1x128xf32, #tpu.memory_space<vmem>>, vector<1x128xf32>
    %8 = vector.broadcast %4 : vector<128x1xf32> to vector<128x128xf32>
    %9 = vector.broadcast %7 : vector<1x128xf32> to vector<128x128xf32>
    %10 = arith.addf %8, %9 : vector<128x128xf32>
    %cst_8 = arith.constant 2.000000e+00 : f32
    %11 = vector.broadcast %cst_8 : f32 to vector<128x128xf32>
    %12 = arith.mulf %11, %6 : vector<128x128xf32>
    %13 = arith.subf %10, %12 : vector<128x128xf32>
    %cst_9 = arith.constant 0.000000e+00 : f32
    %14 = vector.broadcast %cst_9 : f32 to vector<128x128xf32>
    %15 = arith.maximumf %13, %14 : vector<128x128xf32>
    %cst_10 = arith.constant 0.000000e+00 : f32
    %16 = arith.subf %cst_10, %0 : f32
    %17 = vector.broadcast %16 : f32 to vector<128x128xf32>
    %18 = arith.mulf %17, %15 : vector<128x128xf32>
    %19 = math.exp %18 : vector<128x128xf32>
    %c0_11 = arith.constant 0 : index
    %c0_12 = arith.constant 0 : index
    %20 = vector.load %arg5[%c0_11, %c0_12] : memref<128x8xf32, #tpu.memory_space<vmem>>, vector<128x8xf32>
    %cst_13 = arith.constant dense<0.000000e+00> : vector<128x8xf32>
    %21 = tpu.matmul %19, %20, %cst_13 {dimension_numbers = #tpu.dot_dimension_numbers<[1], [0], [0], [1], [0, 0, 1, 1], [], []>} : vector<128x128xf32>, vector<128x8xf32>, vector<128x8xf32> -> vector<128x8xf32>
    %22 = tpu.transpose %21, [1, 0] : vector<128x8xf32> -> vector<8x128xf32>
    %c0_14 = arith.constant 0 : index
    %c0_15 = arith.constant 0 : index
    %23 = vector.load %arg6[%c0_14, %c0_15] : memref<8x128xf32, #tpu.memory_space<vmem>>, vector<8x128xf32>
    tpu.vector_store %arg6[%c0_14, %c0_15], %22 {strides = array<i32>} : memref<8x128xf32, #tpu.memory_space<vmem>>, vector<8x128xf32>,
    return
  }
  func.func @transform_0(%arg0: i32) -> (i32, i32) {
    %c0_i32 = arith.constant 0 : i32
    %c0_i32_0 = arith.constant 0 : i32
    %c0_i32_1 = arith.constant 0 : i32
    return %c0_i32, %c0_i32_0 : i32, i32
  }
  func.func @transform_1(%arg0: i32) -> (i32, i32) {
    %c0_i32 = arith.constant 0 : i32
    %c0_i32_0 = arith.constant 0 : i32
    return %arg0, %c0_i32 : i32, i32
  }
  func.func @transform_2(%arg0: i32) -> (i32, i32) {
    %c0_i32 = arith.constant 0 : i32
    %c0_i32_0 = arith.constant 0 : i32
    %c0_i32_1 = arith.constant 0 : i32
    return %c0_i32, %c0_i32_0 : i32, i32
  }
  func.func @transform_3(%arg0: i32) -> (i32, i32) {
    %c0_i32 = arith.constant 0 : i32
    %c0_i32_0 = arith.constant 0 : i32
    %c0_i32_1 = arith.constant 0 : i32
    return %c0_i32, %c0_i32_0 : i32, i32
  }
  func.func @transform_4(%arg0: i32) -> (i32, i32) {
    %c0_i32 = arith.constant 0 : i32
    %c0_i32_0 = arith.constant 0 : i32
    %c0_i32_1 = arith.constant 0 : i32
    return %c0_i32, %c0_i32_0 : i32, i32
  }
  func.func @transform_5(%arg0: i32) -> (i32, i32) {
    %c0_i32 = arith.constant 0 : i32
    %c0_i32_0 = arith.constant 0 : i32
    return %c0_i32, %arg0 : i32, i32
  }
}

</mosaic_0001>

<llo_original>
// kernel: tpu_custom_call.1
$region0: #{tpu_custom_call.1}
  #allocation0 [shape = 'u32[]', space=smem, size = 0x4, offset = 0x4, fixed_abs, tag = 'smem constant byte address 0x4 - core index']
  #allocation1 [shape = 'u32[144,128]{1,0:T(1,128)}', space=vmem, size = 0x12000, scoped, tag = 'internal scratch']
  #allocation2 [shape = 'f32[1,1]{1,0:T(1,128)S(6)}', space=smem, size = 0x200, scoped, tag = 'scoped memory for tpu_custom_call.1']
  %s0 = inlined_call_operand.<no memory space> [shape: f32[1,1], index: 0, kind: input, shape index: {}]
  %s1 = inlined_call_operand.vmem [shape: f32[256,16], index: 1, kind: input, shape index: {}]
  %s2 = inlined_call_operand.vmem [shape: f32[16,128], index: 2, kind: input, shape index: {}]
  %s3 = inlined_call_operand.vmem [shape: f32[1,128], index: 3, kind: input, shape index: {}]
  %s4 = inlined_call_operand.vmem [shape: f32[128,8], index: 4, kind: input, shape index: {}]
  %s5 = inlined_call_operand.hbm [shape: f32[8,256], index: 5, kind: output, shape index: {}]
  %s6 = sld [smem:[#allocation0]]
  $region53: #{tpu_custom_call.1} parent=0
    _
  %s8 = ssub.s32 1, %s6
  %s9 = scalar_select 0, %s8, %s6
  %10 = sst [smem:[#allocation2]] %s0
  $region1: #{tpu_custom_call.1} parent=0
    #allocation3 [shape = 'u8[8192]{0}', space=vmem, size = 0x2000, scoped, tag = 'output window, operand 0']
    #allocation4 [shape = 's32[2]{0}', space=sflag, size = 0x8, scoped, tag = 'scoped memory for tpu_custom_call.1']
    %11 = vsyncpa [#allocation4], 0
    %s12 = scalar_lea.sflag [#allocation4], 1
    %13 = vsyncpa %s12, 0
    loop: start=0, step=1, limit=4
    $region2: #{tpu_custom_call.1} parent=1 // loop_pre_header
      _
    $region3: #{tpu_custom_call.1} parent=1 // loop_header
      %s15 = sphi 0, %s19
      %p16 = scmp.ge.s32.totalorder %s15, 4
      %s23 = sphi 0, %s23
      %s25 = sphi 0, %s23
      %s26 = sphi 0, %s25
      %s40 = sphi 0, %s26
      %s46 = sphi 0, %s48
      %s49 = sphi 0, %s46
      %s50 = sphi 0, %s49
      %s66 = sphi 0, %s50
      %s70 = sphi 0, %s70
      %s72 = sphi 0, %s70
      %s73 = sphi 0, %s72
      %s87 = sphi 0, %s73
      %s91 = sphi 0, %s91
      %s93 = sphi 0, %s91
      %s94 = sphi 0, %s93
      %s108 = sphi 0, %s94
      %s112 = sphi 0, %s112
      %s114 = sphi 0, %s112
      %s115 = sphi 0, %s114
      %s129 = sphi 0, %s115
      %s135 = sphi 0, %s137
      %s138 = sphi 0, %s135
      %s139 = sphi 0, %s138
      %s155 = sphi 0, %s139
    $region4: #{tpu_custom_call.1} parent=1 // loop_header_branch
      %18 = sbr.rel (%p16) target = $region8
    $region5: #{tpu_custom_call.1} parent=1 // loop_body
      %s20 = ssub.s32 %s15, 1
      %s21 = ssub.s32 %s15, 2
      %s22 = sadd.s32 %s15, 1
      %s24 = sadd.s32 %s23, 1
      %p27 = scmp.eq.s32.totalorder %s15, 1
      %p28 = scmp.ne.s32.totalorder %s23, %s25
      %p29 = scmp.eq.s32.totalorder %s15, 0
      %p30 = por %p28, %p29
      %p31 = scmp.ne.s32.totalorder %s23, %s25
      %p32 = scmp.eq.s32.totalorder %s20, 1
      %p33 = por %p31, %p32
      %p34 = scmp.ne.s32.totalorder %s25, %s26
      %p35 = scmp.eq.s32.totalorder %s20, 0
      %p36 = por %p34, %p35
      %p37 = scmp.ne.s32.totalorder %s25, %s26
      %p38 = scmp.eq.s32.totalorder %s21, 1
      %p39 = por %p37, %p38
      %p41 = scmp.ne.s32.totalorder %s26, %s40
      %p42 = scmp.eq.s32.totalorder %s21, 0
      %p43 = por %p41, %p42
      %s44 = ssub.s32 %s15, %s22
      %p45 = scmp.eq.s32.totalorder %s44, 0
      %s47 = sadd.s32 %s46, 1
      %s48 = scalar_select %p45, %s46, %s47
      %p51 = pneg %p45
      %p52 = scmp.eq.s32.totalorder %s15, 1
      %p53 = por %p51, %p52
      %p54 = scmp.ne.s32.totalorder %s46, %s49
      %p55 = scmp.eq.s32.totalorder %s15, 0
      %p56 = por %p54, %p55
      %p57 = scmp.ne.s32.totalorder %s46, %s49
      %p58 = scmp.eq.s32.totalorder %s20, 1
      %p59 = por %p57, %p58
      %p60 = scmp.ne.s32.totalorder %s49, %s50
      %p61 = scmp.eq.s32.totalorder %s20, 0
      %p62 = por %p60, %p61
      %p63 = scmp.ne.s32.totalorder %s49, %s50
      %p64 = scmp.eq.s32.totalorder %s21, 1
      %p65 = por %p63, %p64
      %p67 = scmp.ne.s32.totalorder %s50, %s66
      %p68 = scmp.eq.s32.totalorder %s21, 0
      %p69 = por %p67, %p68
      %s71 = sadd.s32 %s70, 1
      %p74 = scmp.eq.s32.totalorder %s15, 1
      %p75 = scmp.ne.s32.totalorder %s70, %s72
      %p76 = scmp.eq.s32.totalorder %s15, 0
      %p77 = por %p75, %p76
      %p78 = scmp.ne.s32.totalorder %s70, %s72
      %p79 = scmp.eq.s32.totalorder %s20, 1
      %p80 = por %p78, %p79
      %p81 = scmp.ne.s32.totalorder %s72, %s73
      %p82 = scmp.eq.s32.totalorder %s20, 0
      %p83 = por %p81, %p82
      %p84 = scmp.ne.s32.totalorder %s72, %s73
      %p85 = scmp.eq.s32.totalorder %s21, 1
      %p86 = por %p84, %p85
      %p88 = scmp.ne.s32.totalorder %s73, %s87
      %p89 = scmp.eq.s32.totalorder %s21, 0
      %p90 = por %p88, %p89
      %s92 = sadd.s32 %s91, 1
      %p95 = scmp.eq.s32.totalorder %s15, 1
      %p96 = scmp.ne.s32.totalorder %s91, %s93
      %p97 = scmp.eq.s32.totalorder %s15, 0
      %p98 = por %p96, %p97
      %p99 = scmp.ne.s32.totalorder %s91, %s93
      %p100 = scmp.eq.s32.totalorder %s20, 1
      %p101 = por %p99, %p100
      %p102 = scmp.ne.s32.totalorder %s93, %s94
      %p103 = scmp.eq.s32.totalorder %s20, 0
      %p104 = por %p102, %p103
      %p105 = scmp.ne.s32.totalorder %s93, %s94
      %p106 = scmp.eq.s32.totalorder %s21, 1
      %p107 = por %p105, %p106
      %p109 = scmp.ne.s32.totalorder %s94, %s108
      %p110 = scmp.eq.s32.totalorder %s21, 0
      %p111 = por %p109, %p110
      %s113 = sadd.s32 %s112, 1
      %p116 = scmp.eq.s32.totalorder %s15, 1
      %p117 = scmp.ne.s32.totalorder %s112, %s114
      %p118 = scmp.eq.s32.totalorder %s15, 0
      %p119 = por %p117, %p118
      %p120 = scmp.ne.s32.totalorder %s112, %s114
      %p121 = scmp.eq.s32.totalorder %s20, 1
      %p122 = por %p120, %p121
      %p123 = scmp.ne.s32.totalorder %s114, %s115
      %p124 = scmp.eq.s32.totalorder %s20, 0
      %p125 = por %p123, %p124
      %p126 = scmp.ne.s32.totalorder %s114, %s115
      %p127 = scmp.eq.s32.totalorder %s21, 1
      %p128 = por %p126, %p127
      %p130 = scmp.ne.s32.totalorder %s115, %s129
      %p131 = scmp.eq.s32.totalorder %s21, 0
      %p132 = por %p130, %p131
      %s133 = ssub.s32 %s15, %s22
      %p134 = scmp.eq.s32.totalorder %s133, 0
      %s136 = sadd.s32 %s135, 1
      %s137 = scalar_select %p134, %s135, %s136
      %p140 = pneg %p134
      %p141 = scmp.eq.s32.totalorder %s15, 1
      %p142 = por %p140, %p141
      %p143 = scmp.ne.s32.totalorder %s135, %s138
      %p144 = scmp.eq.s32.totalorder %s15, 0
      %p145 = por %p143, %p144
      %p146 = scmp.ne.s32.totalorder %s135, %s138
      %p147 = scmp.eq.s32.totalorder %s20, 1
      %p148 = por %p146, %p147
      %p149 = scmp.ne.s32.totalorder %s138, %s139
      %p150 = scmp.eq.s32.totalorder %s20, 0
      %p151 = por %p149, %p150
      %p152 = scmp.ne.s32.totalorder %s138, %s139
      %p153 = scmp.eq.s32.totalorder %s21, 1
      %p154 = por %p152, %p153
      %p156 = scmp.ne.s32.totalorder %s139, %s155
      %p157 = scmp.eq.s32.totalorder %s21, 0
      %p158 = por %p156, %p157
      %p159 = scmp.le.s32.totalorder 1, %s15
      %p160 = scmp.lt.s32.totalorder %s15, 3
      %p161 = pnand %p159, %p160
      %p162 = pneg %p161
      // Predicated region
      $region9: #{tpu_custom_call.1} parent=5 // pred_check
        _
      $region10: #{tpu_custom_call.1} parent=5 // pred_check_branch
        %164 = sbr.rel (%p161) target = $region12
      $region11: #{tpu_custom_call.1} parent=5 // pred_region
        %s165 = ssub.s32 %s15, 1
        // Predicated region
        $region13: #{tpu_custom_call.1} parent=11 // pred_check
          %p166 = pneg %p36
        $region14: #{tpu_custom_call.1} parent=11 // pred_check_branch
          %168 = sbr.rel (%p166) target = $region16
        $region15: #{tpu_custom_call.1} parent=11 // pred_region
          _
        $region16: #{tpu_custom_call.1} parent=11 // pred_fallthru
          _
        // Predicated region
        $region17: #{tpu_custom_call.1} parent=11 // pred_check
          %p169 = pneg %p83
        $region18: #{tpu_custom_call.1} parent=11 // pred_check_branch
          %171 = sbr.rel (%p169) target = $region20
        $region19: #{tpu_custom_call.1} parent=11 // pred_region
          _
        $region20: #{tpu_custom_call.1} parent=11 // pred_fallthru
          _
        // Predicated region
        $region21: #{tpu_custom_call.1} parent=11 // pred_check
          %p172 = pneg %p104
        $region22: #{tpu_custom_call.1} parent=11 // pred_check_branch
          %174 = sbr.rel (%p172) target = $region24
        $region23: #{tpu_custom_call.1} parent=11 // pred_region
          _
        $region24: #{tpu_custom_call.1} parent=11 // pred_fallthru
          _
        // Predicated region
        $region25: #{tpu_custom_call.1} parent=11 // pred_check
          %p175 = pneg %p125
        $region26: #{tpu_custom_call.1} parent=11 // pred_check_branch
          %177 = sbr.rel (%p175) target = $region28
        $region27: #{tpu_custom_call.1} parent=11 // pred_region
          _
        $region28: #{tpu_custom_call.1} parent=11 // pred_fallthru
          _
      $region12: #{tpu_custom_call.1} parent=5 // pred_fallthru
        _
      %p178 = scmp.lt.s32.totalorder %s15, 2
      // Predicated region
      $region29: #{tpu_custom_call.1} parent=5 // pred_check
        %p179 = pneg %p178
      $region30: #{tpu_custom_call.1} parent=5 // pred_check_branch
        %181 = sbr.rel (%p179) target = $region32
      $region31: #{tpu_custom_call.1} parent=5 // pred_region
        // Predicated region
        $region33: #{tpu_custom_call.1} parent=31 // pred_check
          %p182 = pneg %p56
        $region34: #{tpu_custom_call.1} parent=31 // pred_check_branch
          %184 = sbr.rel (%p182) target = $region36
        $region35: #{tpu_custom_call.1} parent=31 // pred_region
          %s185 = smul.u32 16, %s15
          %p186 = scmp.lt.s32.totalorder %s185, 31
          %s187 = scalar_select %p186, %s185, 31
          %s188 = smul.addr %s187, 8
          %s189 = scalar_lea.vmem %s1, %s188
          %s190 = smul.u32 16, %s15
        $region36: #{tpu_custom_call.1} parent=31 // pred_fallthru
          _
      $region32: #{tpu_custom_call.1} parent=5 // pred_fallthru
        _
      %p191 = scmp.le.s32.totalorder 1, %s15
      %p192 = scmp.lt.s32.totalorder %s15, 3
      %p193 = pnand %p191, %p192
      %p194 = pneg %p193
      // Predicated region
      $region37: #{tpu_custom_call.1} parent=5 // pred_check
        _
      $region38: #{tpu_custom_call.1} parent=5 // pred_check_branch
        %196 = sbr.rel (%p193) target = $region40
      $region39: #{tpu_custom_call.1} parent=5 // pred_region
        %s197 = ssub.s32 %s15, 1
        %p198 = pneg %p36
        %p199 = pneg %p33
        %s200 = smul.u32 16, %s20
        %p201 = scmp.lt.s32.totalorder %s200, 31
        %s202 = scalar_select %p201, %s200, 31
        %s203 = smul.addr %s202, 8
        %s204 = scalar_lea.vmem %s1, %s203
        %p205 = pneg %p62
        %p206 = pneg %p59
        %p207 = pneg %p83
        %p208 = pneg %p80
        %p209 = pneg %p104
        %p210 = pneg %p101
        %p211 = pneg %p125
        %p212 = pneg %p122
        %p213 = pneg %p151
        %p214 = pneg %p148
        %s215 = sand.u32 %s138, 1
        %s216 = scalar_lea.sflag [#allocation4], %s215
        %s217 = sand.u32 %s138, 1
        %s218 = smul.addr %s217, 8
        %s219 = scalar_lea.vmem [#allocation3], %s218
        %s220 = smul.u32 16, %s20
        %p221 = scmp.lt.s32.totalorder %s220, 31
        %s222 = scalar_select %p221, %s220, 31
        %s223 = smul.addr %s222, 8
        %s224 = scalar_lea.vmem %s1, %s223
        %s225 = smul.u32 16, %s20
        %s226 = sld [smem:[#allocation2]]
        %v227 = vld [vmem:[%s224] sm:$0xff]
        %v228 = vld [vmem:[%s224 + $0x8] sm:$0xff]
        %v229 = vld [vmem:[%s224 + $0x10] sm:$0xff]
        %v230 = vld [vmem:[%s224 + $0x18] sm:$0xff]
        %v231 = vld [vmem:[%s224 + $0x20] sm:$0xff]
        %v232 = vld [vmem:[%s224 + $0x28] sm:$0xff]
        %v233 = vld [vmem:[%s224 + $0x30] sm:$0xff]
        %v234 = vld [vmem:[%s224 + $0x38] sm:$0xff]
        %v235 = vld [vmem:[%s224 + $0x40] sm:$0xff]
        %v236 = vld [vmem:[%s224 + $0x48] sm:$0xff]
        %v237 = vld [vmem:[%s224 + $0x50] sm:$0xff]
        %v238 = vld [vmem:[%s224 + $0x58] sm:$0xff]
        %v239 = vld [vmem:[%s224 + $0x60] sm:$0xff]
        %v240 = vld [vmem:[%s224 + $0x68] sm:$0xff]
        %v241 = vld [vmem:[%s224 + $0x70] sm:$0xff]
        %v242 = vld [vmem:[%s224 + $0x78] sm:$0xff]
        %v243 = vmul.f32 %v227, %v227
        %v244 = vmul.f32 %v228, %v228
        %v245 = vmul.f32 %v229, %v229
        %v246 = vmul.f32 %v230, %v230
        %v247 = vmul.f32 %v231, %v231
        %v248 = vmul.f32 %v232, %v232
        %v249 = vmul.f32 %v233, %v233
        %v250 = vmul.f32 %v234, %v234
        %v251 = vmul.f32 %v235, %v235
        %v252 = vmul.f32 %v236, %v236
        %v253 = vmul.f32 %v237, %v237
        %v254 = vmul.f32 %v238, %v238
        %v255 = vmul.f32 %v239, %v239
        %v256 = vmul.f32 %v240, %v240
        %v257 = vmul.f32 %v241, %v241
        %v258 = vmul.f32 %v242, %v242
        %vm259 = vcmask 130048
        %v260 = vsel %vm259, %v243, 0.0
        %261 = vadd.xlane.f32.xlu0 %v260
        %v262 = vpop.xlane.xlu0 %261
        %v263 = vsel %vm259, %v244, 0.0
        %264 = vadd.xlane.f32.xlu0 %v263
        %v265 = vpop.xlane.xlu0 %264
        %v266 = vsel %vm259, %v245, 0.0
        %267 = vadd.xlane.f32.xlu0 %v266
        %v268 = vpop.xlane.xlu0 %267
        %v269 = vsel %vm259, %v246, 0.0
        %270 = vadd.xlane.f32.xlu0 %v269
        %v271 = vpop.xlane.xlu0 %270
        %v272 = vsel %vm259, %v247, 0.0
        %273 = vadd.xlane.f32.xlu0 %v272
        %v274 = vpop.xlane.xlu0 %273
        %v275 = vsel %vm259, %v248, 0.0
        %276 = vadd.xlane.f32.xlu0 %v275
        %v277 = vpop.xlane.xlu0 %276
        %v278 = vsel %vm259, %v249, 0.0
        %279 = vadd.xlane.f32.xlu0 %v278
        %v280 = vpop.xlane.xlu0 %279
        %v281 = vsel %vm259, %v250, 0.0
        %282 = vadd.xlane.f32.xlu0 %v281
        %v283 = vpop.xlane.xlu0 %282
        %v284 = vsel %vm259, %v251, 0.0
        %285 = vadd.xlane.f32.xlu0 %v284
        %v286 = vpop.xlane.xlu0 %285
        %v287 = vsel %vm259, %v252, 0.0
        %288 = vadd.xlane.f32.xlu0 %v287
        %v289 = vpop.xlane.xlu0 %288
        %v290 = vsel %vm259, %v253, 0.0
        %291 = vadd.xlane.f32.xlu0 %v290
        %v292 = vpop.xlane.xlu0 %291
        %v293 = vsel %vm259, %v254, 0.0
        %294 = vadd.xlane.f32.xlu0 %v293
        %v295 = vpop.xlane.xlu0 %294
        %v296 = vsel %vm259, %v255, 0.0
        %297 = vadd.xlane.f32.xlu0 %v296
        %v298 = vpop.xlane.xlu0 %297
        %v299 = vsel %vm259, %v256, 0.0
        %300 = vadd.xlane.f32.xlu0 %v299
        %v301 = vpop.xlane.xlu0 %300
        %v302 = vsel %vm259, %v257, 0.0
        %303 = vadd.xlane.f32.xlu0 %v302
        %v304 = vpop.xlane.xlu0 %303
        %v305 = vsel %vm259, %v258, 0.0
        %306 = vadd.xlane.f32.xlu0 %v305
        %v307 = vpop.xlane.xlu0 %306
        %v308 = vld [vmem:[%s2] sm:$0xff]
        %v309 = vld [vmem:[%s2 + $0x8] sm:$0xff]
        %v311 = vsel %vm259, %v227, 0
        %v314 = vsel %vm259, %v228, 0
        %v317 = vsel %vm259, %v229, 0
        %v320 = vsel %vm259, %v230, 0
        %v323 = vsel %vm259, %v231, 0
        %v326 = vsel %vm259, %v232, 0
        %v329 = vsel %vm259, %v233, 0
        %v332 = vsel %vm259, %v234, 0
        %v335 = vsel %vm259, %v235, 0
        %v338 = vsel %vm259, %v236, 0
        %v341 = vsel %vm259, %v237, 0
        %v344 = vsel %vm259, %v238, 0
        %v347 = vsel %vm259, %v239, 0
        %v350 = vsel %vm259, %v240, 0
        %v353 = vsel %vm259, %v241, 0
        %v356 = vsel %vm259, %v242, 0
        %358 = vmatprep.subr.mxu0 0.0
        %359 = vmatpush1.msra.mxu0 %v308
        %360 = vmatprep.subr.mxu0 0.0
        %361 = vmatpush1.msra.mxu0 %v309
        %362 = vmatprep.subr.mxu0 0.0
        %363 = vmatpush1.msra.mxu0 0.0
        %364 = vmatprep.subr.mxu0 0.0
        %365 = vmatpush1.msra.mxu0 0.0
        %366 = vmatprep.subr.mxu0 0.0
        %367 = vmatpush1.msra.mxu0 0.0
        %368 = vmatprep.subr.mxu0 0.0
        %369 = vmatpush1.msra.mxu0 0.0
        %370 = vmatprep.subr.mxu0 0.0
        %371 = vmatpush1.msra.mxu0 0.0
        %372 = vmatprep.subr.mxu0 0.0
        %373 = vmatpush1.msra.mxu0 0.0
        %374 = vmatprep.subr.mxu0 0.0
        %375 = vmatpush1.msra.mxu0 0.0
        %376 = vmatprep.subr.mxu0 0.0
        %377 = vmatpush1.msra.mxu0 0.0
        %378 = vmatprep.subr.mxu0 0.0
        %379 = vmatpush1.msra.mxu0 0.0
        %380 = vmatprep.subr.mxu0 0.0
        %381 = vmatpush1.msra.mxu0 0.0
        %382 = vmatprep.subr.mxu0 0.0
        %383 = vmatpush1.msra.mxu0 0.0
        %384 = vmatprep.subr.mxu0 0.0
        %385 = vmatpush1.msra.mxu0 0.0
        %386 = vmatprep.subr.mxu0 0.0
        %387 = vmatpush1.msra.mxu0 0.0
        %388 = vmatprep.subr.mxu0 0.0
        %389 = vmatpush1.msra.mxu0 0.0
        %390 = vmatprep.subr.mxu0 0.0
        %391 = vmatpush1.msra.mxu0 0.0
        %392 = vmatprep.subr.mxu0 0.0
        %393 = vmatpush1.msra.mxu0 0.0
        %394 = vmatprep.subr.mxu0 0.0
        %395 = vmatpush1.msra.mxu0 0.0
        %396 = vmatprep.subr.mxu0 0.0
        %397 = vmatpush1.msra.mxu0 0.0
        %398 = vmatprep.subr.mxu0 0.0
        %399 = vmatpush1.msra.mxu0 0.0
        %400 = vmatprep.subr.mxu0 0.0
        %401 = vmatpush1.msra.mxu0 0.0
        %402 = vmatprep.subr.mxu0 0.0
        %403 = vmatpush1.msra.mxu0 0.0
        %404 = vmatprep.subr.mxu0 0.0
        %405 = vmatpush1.msra.mxu0 0.0
        %406 = vmatprep.subr.mxu0 0.0
        %407 = vmatpush1.msra.mxu0 0.0
        %408 = vmatprep.subr.mxu0 0.0
        %409 = vmatpush1.msra.mxu0 0.0
        %410 = vmatprep.subr.mxu0 0.0
        %411 = vmatpush1.msra.mxu0 0.0
        %412 = vmatprep.subr.mxu0 0.0
        %413 = vmatpush1.msra.mxu0 0.0
        %414 = vmatprep.subr.mxu0 0.0
        %415 = vmatpush1.msra.mxu0 0.0
        %416 = vmatprep.subr.mxu0 0.0
        %417 = vmatpush1.msra.mxu0 0.0
        %418 = vmatprep.subr.mxu0 0.0
        %419 = vmatpush1.msra.mxu0 0.0
        %420 = vmatprep.subr.mxu0 0.0
        %421 = vmatpush1.msra.mxu0 0.0
        %422 = vmatprep.mubr.f32.mxu0 0.0
        %423 = vmatmul.mubr.f32.gmra.mrb[0].mxu0 %v311
        %v424 = vpop.f32.mrb[0].mxu0
        %v425 = vadd.f32 0.0, %v424
        %v426 = vpop.f32.mrb[0].mxu0
        %427 = vmatprep.mubr.f32.mxu0 0.0
        %428 = vmatmul.mubr.f32.gmra.mrb[0].mxu0 %v314
        %v429 = vpop.f32.mrb[0].mxu0
        %v430 = vadd.f32 0.0, %v429
        %v431 = vpop.f32.mrb[0].mxu0
        %432 = vmatprep.mubr.f32.mxu0 0.0
        %433 = vmatmul.mubr.f32.gmra.mrb[0].mxu0 %v317
        %v434 = vpop.f32.mrb[0].mxu0
        %v435 = vadd.f32 0.0, %v434
        %v436 = vpop.f32.mrb[0].mxu0
        %437 = vmatprep.mubr.f32.mxu0 0.0
        %438 = vmatmul.mubr.f32.gmra.mrb[0].mxu0 %v320
        %v439 = vpop.f32.mrb[0].mxu0
        %v440 = vadd.f32 0.0, %v439
        %v441 = vpop.f32.mrb[0].mxu0
        %442 = vmatprep.mubr.f32.mxu0 0.0
        %443 = vmatmul.mubr.f32.gmra.mrb[0].mxu0 %v323
        %v444 = vpop.f32.mrb[0].mxu0
        %v445 = vadd.f32 0.0, %v444
        %v446 = vpop.f32.mrb[0].mxu0
        %447 = vmatprep.mubr.f32.mxu0 0.0
        %448 = vmatmul.mubr.f32.gmra.mrb[0].mxu0 %v326
        %v449 = vpop.f32.mrb[0].mxu0
        %v450 = vadd.f32 0.0, %v449
        %v451 = vpop.f32.mrb[0].mxu0
        %452 = vmatprep.mubr.f32.mxu0 0.0
        %453 = vmatmul.mubr.f32.gmra.mrb[0].mxu0 %v329
        %v454 = vpop.f32.mrb[0].mxu0
        %v455 = vadd.f32 0.0, %v454
        %v456 = vpop.f32.mrb[0].mxu0
        %457 = vmatprep.mubr.f32.mxu0 0.0
        %458 = vmatmul.mubr.f32.gmra.mrb[0].mxu0 %v332
        %v459 = vpop.f32.mrb[0].mxu0
        %v460 = vadd.f32 0.0, %v459
        %v461 = vpop.f32.mrb[0].mxu0
        %462 = vmatprep.mubr.f32.mxu0 0.0
        %463 = vmatmul.mubr.f32.gmra.mrb[0].mxu0 %v335
        %v464 = vpop.f32.mrb[0].mxu0
        %v465 = vadd.f32 0.0, %v464
        %v466 = vpop.f32.mrb[0].mxu0
        %467 = vmatprep.mubr.f32.mxu0 0.0
        %468 = vmatmul.mubr.f32.gmra.mrb[0].mxu0 %v338
        %v469 = vpop.f32.mrb[0].mxu0
        %v470 = vadd.f32 0.0, %v469
        %v471 = vpop.f32.mrb[0].mxu0
        %472 = vmatprep.mubr.f32.mxu0 0.0
        %473 = vmatmul.mubr.f32.gmra.mrb[0].mxu0 %v341
        %v474 = vpop.f32.mrb[0].mxu0
        %v475 = vadd.f32 0.0, %v474
        %v476 = vpop.f32.mrb[0].mxu0
        %477 = vmatprep.mubr.f32.mxu0 0.0
        %478 = vmatmul.mubr.f32.gmra.mrb[0].mxu0 %v344
        %v479 = vpop.f32.mrb[0].mxu0
        %v480 = vadd.f32 0.0, %v479
        %v481 = vpop.f32.mrb[0].mxu0
        %482 = vmatprep.mubr.f32.mxu0 0.0
        %483 = vmatmul.mubr.f32.gmra.mrb[0].mxu0 %v347
        %v484 = vpop.f32.mrb[0].mxu0
        %v485 = vadd.f32 0.0, %v484
        %v486 = vpop.f32.mrb[0].mxu0
        %487 = vmatprep.mubr.f32.mxu0 0.0
        %488 = vmatmul.mubr.f32.gmra.mrb[0].mxu0 %v350
        %v489 = vpop.f32.mrb[0].mxu0
        %v490 = vadd.f32 0.0, %v489
        %v491 = vpop.f32.mrb[0].mxu0
        %492 = vmatprep.mubr.f32.mxu0 0.0
        %493 = vmatmul.mubr.f32.gmra.mrb[0].mxu0 %v353
        %v494 = vpop.f32.mrb[0].mxu0
        %v495 = vadd.f32 0.0, %v494
        %v496 = vpop.f32.mrb[0].mxu0
        %497 = vmatprep.mubr.f32.mxu0 0.0
        %498 = vmatmul.mubr.f32.gmra.mrb[0].mxu0 %v356
        %v499 = vpop.f32.mrb[0].mxu0
        %v500 = vadd.f32 0.0, %v499
        %v501 = vpop.f32.mrb[0].mxu0
        %502 = vdwg.mxu0
        %v503 = vld [vmem:[%s3] sm:$0x1]
        %v505 = vlaneseq
        %v506 = vshrl.u32 %v505, 7
        %v507 = vsub.s32 0, %v506
        %v508 = vrot.slane %v503, %v507
        %v510 = vadd.f32 %v262, %v508
        %v511 = vadd.f32 %v265, %v508
        %v512 = vadd.f32 %v268, %v508
        %v513 = vadd.f32 %v271, %v508
        %v514 = vadd.f32 %v274, %v508
        %v515 = vadd.f32 %v277, %v508
        %v516 = vadd.f32 %v280, %v508
        %v517 = vadd.f32 %v283, %v508
        %v518 = vadd.f32 %v286, %v508
        %v519 = vadd.f32 %v289, %v508
        %v520 = vadd.f32 %v292, %v508
        %v521 = vadd.f32 %v295, %v508
        %v522 = vadd.f32 %v298, %v508
        %v523 = vadd.f32 %v301, %v508
        %v524 = vadd.f32 %v304, %v508
        %v525 = vadd.f32 %v307, %v508
        %v526 = vmul.f32 %v425, 2.0
        %v527 = vmul.f32 %v430, 2.0
        %v528 = vmul.f32 %v435, 2.0
        %v529 = vmul.f32 %v440, 2.0
        %v530 = vmul.f32 %v445, 2.0
        %v531 = vmul.f32 %v450, 2.0
        %v532 = vmul.f32 %v455, 2.0
        %v533 = vmul.f32 %v460, 2.0
        %v534 = vmul.f32 %v465, 2.0
        %v535 = vmul.f32 %v470, 2.0
        %v536 = vmul.f32 %v475, 2.0
        %v537 = vmul.f32 %v480, 2.0
        %v538 = vmul.f32 %v485, 2.0
        %v539 = vmul.f32 %v490, 2.0
        %v540 = vmul.f32 %v495, 2.0
        %v541 = vmul.f32 %v500, 2.0
        %v542 = vsub.f32 %v510, %v526
        %v543 = vsub.f32 %v511, %v527
        %v544 = vsub.f32 %v512, %v528
        %v545 = vsub.f32 %v513, %v529
        %v546 = vsub.f32 %v514, %v530
        %v547 = vsub.f32 %v515, %v531
        %v548 = vsub.f32 %v516, %v532
        %v549 = vsub.f32 %v517, %v533
        %v550 = vsub.f32 %v518, %v534
        %v551 = vsub.f32 %v519, %v535
        %v552 = vsub.f32 %v520, %v536
        %v553 = vsub.f32 %v521, %v537
        %v554 = vsub.f32 %v522, %v538
        %v555 = vsub.f32 %v523, %v539
        %v556 = vsub.f32 %v524, %v540
        %v557 = vsub.f32 %v525, %v541
        %v558 = vmax.f32 %v542, 0.0
        %v559 = vmax.f32 %v543, 0.0
        %v560 = vmax.f32 %v544, 0.0
        %v561 = vmax.f32 %v545, 0.0
        %v562 = vmax.f32 %v546, 0.0
        %v563 = vmax.f32 %v547, 0.0
        %v564 = vmax.f32 %v548, 0.0
        %v565 = vmax.f32 %v549, 0.0
        %v566 = vmax.f32 %v550, 0.0
        %v567 = vmax.f32 %v551, 0.0
        %v568 = vmax.f32 %v552, 0.0
        %v569 = vmax.f32 %v553, 0.0
        %v570 = vmax.f32 %v554, 0.0
        %v571 = vmax.f32 %v555, 0.0
        %v572 = vmax.f32 %v556, 0.0
        %v573 = vmax.f32 %v557, 0.0
        %s574 = ssub.f32 0.0, %s226
        %v575 = vstv %s574
        %v576 = vmul.f32 %v575, %v558
        %v577 = vmul.f32 %v575, %v559
        %v578 = vmul.f32 %v575, %v560
        %v579 = vmul.f32 %v575, %v561
        %v580 = vmul.f32 %v575, %v562
        %v581 = vmul.f32 %v575, %v563
        %v582 = vmul.f32 %v575, %v564
        %v583 = vmul.f32 %v575, %v565
        %v584 = vmul.f32 %v575, %v566
        %v585 = vmul.f32 %v575, %v567
        %v586 = vmul.f32 %v575, %v568
        %v587 = vmul.f32 %v575, %v569
        %v588 = vmul.f32 %v575, %v570
        %v589 = vmul.f32 %v575, %v571
        %v590 = vmul.f32 %v575, %v572
        %v591 = vmul.f32 %v575, %v573
        %v592 = vmul.f32 %v576, 1.442695
        %v593 = vpow.pop %v592
        %v594 = vmul.f32 %v577, 1.442695
        %v595 = vpow.pop %v594
        %v596 = vmul.f32 %v578, 1.442695
        %v597 = vpow.pop %v596
        %v598 = vmul.f32 %v579, 1.442695
        %v599 = vpow.pop %v598
        %v600 = vmul.f32 %v580, 1.442695
        %v601 = vpow.pop %v600
        %v602 = vmul.f32 %v581, 1.442695
        %v603 = vpow.pop %v602
        %v604 = vmul.f32 %v582, 1.442695
        %v605 = vpow.pop %v604
        %v606 = vmul.f32 %v583, 1.442695
        %v607 = vpow.pop %v606
        %v608 = vmul.f32 %v584, 1.442695
        %v609 = vpow.pop %v608
        %v610 = vmul.f32 %v585, 1.442695
        %v611 = vpow.pop %v610
        %v612 = vmul.f32 %v586, 1.442695
        %v613 = vpow.pop %v612
        %v614 = vmul.f32 %v587, 1.442695
        %v615 = vpow.pop %v614
        %v616 = vmul.f32 %v588, 1.442695
        %v617 = vpow.pop %v616
        %v618 = vmul.f32 %v589, 1.442695
        %v619 = vpow.pop %v618
        %v620 = vmul.f32 %v590, 1.442695
        %v621 = vpow.pop %v620
        %v622 = vmul.f32 %v591, 1.442695
        %v623 = vpow.pop %v622
        %v624 = vld [vmem:[%s4] sm:$0xff]
        %v625 = vld [vmem:[%s4 + $0x8] sm:$0xff]
        %v626 = vld [vmem:[%s4 + $0x10] sm:$0xff]
        %v627 = vld [vmem:[%s4 + $0x18] sm:$0xff]
        %v628 = vld [vmem:[%s4 + $0x20] sm:$0xff]
        %v629 = vld [vmem:[%s4 + $0x28] sm:$0xff]
        %v630 = vld [vmem:[%s4 + $0x30] sm:$0xff]
        %v631 = vld [vmem:[%s4 + $0x38] sm:$0xff]
        %v632 = vld [vmem:[%s4 + $0x40] sm:$0xff]
        %v633 = vld [vmem:[%s4 + $0x48] sm:$0xff]
        %v634 = vld [vmem:[%s4 + $0x50] sm:$0xff]
        %v635 = vld [vmem:[%s4 + $0x58] sm:$0xff]
        %v636 = vld [vmem:[%s4 + $0x60] sm:$0xff]
        %v637 = vld [vmem:[%s4 + $0x68] sm:$0xff]
        %v638 = vld [vmem:[%s4 + $0x70] sm:$0xff]
        %v639 = vld [vmem:[%s4 + $0x78] sm:$0xff]
        %640 = vmatprep.subr.mxu0 0.0
        %641 = vmatpush1.msra.mxu0 %v624
        %642 = vmatprep.subr.mxu0 0.0
        %643 = vmatpush1.msra.mxu0 %v625
        %644 = vmatprep.subr.mxu0 0.0
        %645 = vmatpush1.msra.mxu0 %v626
        %646 = vmatprep.subr.mxu0 0.0
        %647 = vmatpush1.msra.mxu0 %v627
        %648 = vmatprep.subr.mxu0 0.0
        %649 = vmatpush1.msra.mxu0 %v628
        %650 = vmatprep.subr.mxu0 0.0
        %651 = vmatpush1.msra.mxu0 %v629
        %652 = vmatprep.subr.mxu0 0.0
        %653 = vmatpush1.msra.mxu0 %v630
        %654 = vmatprep.subr.mxu0 0.0
        %655 = vmatpush1.msra.mxu0 %v631
        %656 = vmatprep.subr.mxu0 0.0
        %657 = vmatpush1.msra.mxu0 %v632
        %658 = vmatprep.subr.mxu0 0.0
        %659 = vmatpush1.msra.mxu0 %v633
        %660 = vmatprep.subr.mxu0 0.0
        %661 = vmatpush1.msra.mxu0 %v634
        %662 = vmatprep.subr.mxu0 0.0
        %663 = vmatpush1.msra.mxu0 %v635
        %664 = vmatprep.subr.mxu0 0.0
        %665 = vmatpush1.msra.mxu0 %v636
        %666 = vmatprep.subr.mxu0 0.0
        %667 = vmatpush1.msra.mxu0 %v637
        %668 = vmatprep.subr.mxu0 0.0
        %669 = vmatpush1.msra.mxu0 %v638
        %670 = vmatprep.subr.mxu0 0.0
        %671 = vmatpush1.msra.mxu0 %v639
        %672 = vmatprep.subr.mxu0 0.0
        %673 = vmatpush1.msra.mxu0 0.0
        %674 = vmatprep.subr.mxu0 0.0
        %675 = vmatpush1.msra.mxu0 0.0
        %676 = vmatprep.subr.mxu0 0.0
        %677 = vmatpush1.msra.mxu0 0.0
        %678 = vmatprep.subr.mxu0 0.0
        %679 = vmatpush1.msra.mxu0 0.0
        %680 = vmatprep.subr.mxu0 0.0
        %681 = vmatpush1.msra.mxu0 0.0
        %682 = vmatprep.subr.mxu0 0.0
        %683 = vmatpush1.msra.mxu0 0.0
        %684 = vmatprep.subr.mxu0 0.0
        %685 = vmatpush1.msra.mxu0 0.0
        %686 = vmatprep.subr.mxu0 0.0
        %687 = vmatpush1.msra.mxu0 0.0
        %688 = vmatprep.subr.mxu0 0.0
        %689 = vmatpush1.msra.mxu0 0.0
        %690 = vmatprep.subr.mxu0 0.0
        %691 = vmatpush1.msra.mxu0 0.0
        %692 = vmatprep.subr.mxu0 0.0
        %693 = vmatpush1.msra.mxu0 0.0
        %694 = vmatprep.subr.mxu0 0.0
        %695 = vmatpush1.msra.mxu0 0.0
        %696 = vmatprep.subr.mxu0 0.0
        %697 = vmatpush1.msra.mxu0 0.0
        %698 = vmatprep.subr.mxu0 0.0
        %699 = vmatpush1.msra.mxu0 0.0
        %700 = vmatprep.subr.mxu0 0.0
        %701 = vmatpush1.msra.mxu0 0.0
        %702 = vmatprep.subr.mxu0 0.0
        %703 = vmatpush1.msra.mxu0 0.0
        %704 = vmatprep.mubr.f32.mxu0 0.0
        %705 = vmatmul.mubr.f32.gmra.mrb[0].mxu0 %v593
        %v706 = vpop.f32.mrb[0].mxu0
        %v707 = vadd.f32 0.0, %v706
        %v708 = vpop.f32.mrb[0].mxu0
        %709 = vmatprep.mubr.f32.mxu0 0.0
        %710 = vmatmul.mubr.f32.gmra.mrb[0].mxu0 %v595
        %v711 = vpop.f32.mrb[0].mxu0
        %v712 = vadd.f32 0.0, %v711
        %v713 = vpop.f32.mrb[0].mxu0
        %714 = vmatprep.mubr.f32.mxu0 0.0
        %715 = vmatmul.mubr.f32.gmra.mrb[0].mxu0 %v597
        %v716 = vpop.f32.mrb[0].mxu0
        %v717 = vadd.f32 0.0, %v716
        %v718 = vpop.f32.mrb[0].mxu0
        %719 = vmatprep.mubr.f32.mxu0 0.0
        %720 = vmatmul.mubr.f32.gmra.mrb[0].mxu0 %v599
        %v721 = vpop.f32.mrb[0].mxu0
        %v722 = vadd.f32 0.0, %v721
        %v723 = vpop.f32.mrb[0].mxu0
        %724 = vmatprep.mubr.f32.mxu0 0.0
        %725 = vmatmul.mubr.f32.gmra.mrb[0].mxu0 %v601
        %v726 = vpop.f32.mrb[0].mxu0
        %v727 = vadd.f32 0.0, %v726
        %v728 = vpop.f32.mrb[0].mxu0
        %729 = vmatprep.mubr.f32.mxu0 0.0
        %730 = vmatmul.mubr.f32.gmra.mrb[0].mxu0 %v603
        %v731 = vpop.f32.mrb[0].mxu0
        %v732 = vadd.f32 0.0, %v731
        %v733 = vpop.f32.mrb[0].mxu0
        %734 = vmatprep.mubr.f32.mxu0 0.0
        %735 = vmatmul.mubr.f32.gmra.mrb[0].mxu0 %v605
        %v736 = vpop.f32.mrb[0].mxu0
        %v737 = vadd.f32 0.0, %v736
        %v738 = vpop.f32.mrb[0].mxu0
        %739 = vmatprep.mubr.f32.mxu0 0.0
        %740 = vmatmul.mubr.f32.gmra.mrb[0].mxu0 %v607
        %v741 = vpop.f32.mrb[0].mxu0
        %v742 = vadd.f32 0.0, %v741
        %v743 = vpop.f32.mrb[0].mxu0
        %744 = vmatprep.mubr.f32.mxu0 0.0
        %745 = vmatmul.mubr.f32.gmra.mrb[0].mxu0 %v609
        %v746 = vpop.f32.mrb[0].mxu0
        %v747 = vadd.f32 0.0, %v746
        %v748 = vpop.f32.mrb[0].mxu0
        %749 = vmatprep.mubr.f32.mxu0 0.0
        %750 = vmatmul.mubr.f32.gmra.mrb[0].mxu0 %v611
        %v751 = vpop.f32.mrb[0].mxu0
        %v752 = vadd.f32 0.0, %v751
        %v753 = vpop.f32.mrb[0].mxu0
        %754 = vmatprep.mubr.f32.mxu0 0.0
        %755 = vmatmul.mubr.f32.gmra.mrb[0].mxu0 %v613
        %v756 = vpop.f32.mrb[0].mxu0
        %v757 = vadd.f32 0.0, %v756
        %v758 = vpop.f32.mrb[0].mxu0
        %759 = vmatprep.mubr.f32.mxu0 0.0
        %760 = vmatmul.mubr.f32.gmra.mrb[0].mxu0 %v615
        %v761 = vpop.f32.mrb[0].mxu0
        %v762 = vadd.f32 0.0, %v761
        %v763 = vpop.f32.mrb[0].mxu0
        %764 = vmatprep.mubr.f32.mxu0 0.0
        %765 = vmatmul.mubr.f32.gmra.mrb[0].mxu0 %v617
        %v766 = vpop.f32.mrb[0].mxu0
        %v767 = vadd.f32 0.0, %v766
        %v768 = vpop.f32.mrb[0].mxu0
        %769 = vmatprep.mubr.f32.mxu0 0.0
        %770 = vmatmul.mubr.f32.gmra.mrb[0].mxu0 %v619
        %v771 = vpop.f32.mrb[0].mxu0
        %v772 = vadd.f32 0.0, %v771
        %v773 = vpop.f32.mrb[0].mxu0
        %774 = vmatprep.mubr.f32.mxu0 0.0
        %775 = vmatmul.mubr.f32.gmra.mrb[0].mxu0 %v621
        %v776 = vpop.f32.mrb[0].mxu0
        %v777 = vadd.f32 0.0, %v776
        %v778 = vpop.f32.mrb[0].mxu0
        %779 = vmatprep.mubr.f32.mxu0 0.0
        %780 = vmatmul.mubr.f32.gmra.mrb[0].mxu0 %v623
        %v781 = vpop.f32.mrb[0].mxu0
        %v782 = vadd.f32 0.0, %v781
        %v783 = vpop.f32.mrb[0].mxu0
        %784 = vdwg.mxu0
        %785 = vxpose.xlu0.b32.start [1/16] %v707, 128
        %786 = vxpose.xlu0.b32.cont [2/16] %v712, 128
        %787 = vxpose.xlu0.b32.cont [3/16] %v717, 128
        %788 = vxpose.xlu0.b32.cont [4/16] %v722, 128
        %789 = vxpose.xlu0.b32.cont [5/16] %v727, 128
        %790 = vxpose.xlu0.b32.cont [6/16] %v732, 128
        %791 = vxpose.xlu0.b32.cont [7/16] %v737, 128
        %792 = vxpose.xlu0.b32.cont [8/16] %v742, 128
        %793 = vxpose.xlu0.b32.cont [9/16] %v747, 128
        %794 = vxpose.xlu0.b32.cont [10/16] %v752, 128
        %795 = vxpose.xlu0.b32.cont [11/16] %v757, 128
        %796 = vxpose.xlu0.b32.cont [12/16] %v762, 128
        %797 = vxpose.xlu0.b32.cont [13/16] %v767, 128
        %798 = vxpose.xlu0.b32.cont [14/16] %v772, 128
        %799 = vxpose.xlu0.b32.cont [15/16] %v777, 128
        %800 = vxpose.xlu0.b32.end [16/16] %v782, 128
        %v801 = vpop.trf.xlu0
        %v802 = vpop.trf.xlu0
        %v803 = vpop.trf.xlu0
        %v804 = vpop.trf.xlu0
        %v805 = vpop.trf.xlu0
        %v806 = vpop.trf.xlu0
        %v807 = vpop.trf.xlu0
        %v808 = vpop.trf.xlu0
        %v809 = vpop.trf.xlu0
        %v810 = vpop.trf.xlu0
        %v811 = vpop.trf.xlu0
        %v812 = vpop.trf.xlu0
        %v813 = vpop.trf.xlu0
        %v814 = vpop.trf.xlu0
        %v815 = vpop.trf.xlu0
        %v816 = vpop.trf.xlu0
        %817 = vst [vmem:[%s219] sm:$0xff] %v801
        %s818 = sand.u32 %s138, 1
        %s819 = scalar_lea.sflag [#allocation4], %s818
        %s820 = sand.u32 %s138, 1
        %s821 = smul.addr %s820, 8
        %s822 = scalar_lea.vmem [#allocation3], %s821
        // Predicated region
        $region41: #{tpu_custom_call.1} parent=39 // pred_check
          %p823 = pneg %p148
        $region42: #{tpu_custom_call.1} parent=39 // pred_check_branch
          %825 = sbr.rel (%p823) target = $region44
        $region43: #{tpu_custom_call.1} parent=39 // pred_region
          %s827 = ssub.s32 128, 128
          %828 = vsyncadd %s819, %s827
          %s829 = smul.addr %s20, 128
          %s830 = scalar_lea.hbm %s5, %s829
          %s832 = sshll.u32 %s822, 4
          %s833 = int_to_ptr.vmem [resolvable:$true] %s832
          %835 = dma.vmem_to_hbm [thread:$0]  %s833, 128, %s830, %s819
        $region44: #{tpu_custom_call.1} parent=39 // pred_fallthru
          _
      $region40: #{tpu_custom_call.1} parent=5 // pred_fallthru
        _
      %p836 = scmp.le.s32.totalorder 2, %s15
      // Predicated region
      $region45: #{tpu_custom_call.1} parent=5 // pred_check
        %p837 = pneg %p836
      $region46: #{tpu_custom_call.1} parent=5 // pred_check_branch
        %839 = sbr.rel (%p837) target = $region48
      $region47: #{tpu_custom_call.1} parent=5 // pred_region
        %s840 = ssub.s32 %s15, 2
        // Predicated region
        $region49: #{tpu_custom_call.1} parent=47 // pred_check
          %p841 = pneg %p154
        $region50: #{tpu_custom_call.1} parent=47 // pred_check_branch
          %843 = sbr.rel (%p841) target = $region52
        $region51: #{tpu_custom_call.1} parent=47 // pred_region
          %s844 = sand.u32 %s139, 1
          %s845 = scalar_lea.sflag [#allocation4], %s844
          %s846 = sand.u32 %s139, 1
          %s847 = smul.addr %s846, 8
          %s848 = scalar_lea.vmem [#allocation3], %s847
          %849 = dma.done %s845, 128
        $region52: #{tpu_custom_call.1} parent=47 // pred_fallthru
          _
      $region48: #{tpu_custom_call.1} parent=5 // pred_fallthru
        _
    $region6: #{tpu_custom_call.1} parent=1 // loop_footer
      %s19 = sadd.s32 1, %s15
    $region7: #{tpu_custom_call.1} parent=1 // loop_footer_branch
      %14 = sbr.rel target = $region3
    $region8: #{tpu_custom_call.1} parent=1 // loop_exit
      _
    %850 = vsyncpa [#allocation4], 1
    %s851 = scalar_lea.sflag [#allocation4], 1
    %852 = vsyncpa %s851, 1

</llo_original>
